<compile_context>
chip_gen: v5e
topology: v5e:2x2
jax: 0.10.0
libtpu: 0.0.40
codegen_flags: <defaults>
</compile_context>

<pallas_src>
import jax
import jax.numpy as jnp
from jax import lax
from jax.experimental import pallas as pl
from jax.experimental.pallas import tpu as pltpu

BN_EPS = 1e-5


def _gelu_exact(x):
    # PyTorch F.gelu default: 0.5 * x * (1 + erf(x / sqrt(2)))
    return 0.5 * x * (1.0 + lax.erf(x * 0.7071067811865476))


def _bn_eval(x, gamma, beta, mean, var):
    inv = lax.rsqrt(var + BN_EPS)
    return (x - mean) * inv * gamma + beta


def meta_classifier_kernel(
    x_ref,                     # (6, TB)   input, batch in lanes
    w1_ref, b1_ref,            # (32, 6), (32, 1)
    w2_ref, b2_ref,            # (64, 32), (64, 1)   (BN1 folded in)
    w3_ref, b3_ref,            # (3, 64), (3, 1)     (BN2 folded in)
    out_ref,                   # (3, TB)
):
    x = x_ref[...]                                                     # (6, TB)

    # fc1 + GELU  (dropout == identity in eval)
    h1 = jnp.dot(w1_ref[...], x, preferred_element_type=jnp.float32) + b1_ref[...]
    h1 = _gelu_exact(h1)                                               # (32, TB)

    # fc2' + GELU  (BN1 folded into w2/b2)
    h2 = jnp.dot(w2_ref[...], h1, preferred_element_type=jnp.float32) + b2_ref[...]
    h2 = _gelu_exact(h2)                                               # (64, TB)

    # fc3' + softmax over the 3-class sublane axis (BN2 folded into w3/b3).
    logits = jnp.dot(w3_ref[...], h2, preferred_element_type=jnp.float32) + b3_ref[...]
    l0 = logits[0:1, :]
    l1 = logits[1:2, :]
    l2 = logits[2:3, :]
    m = jnp.maximum(jnp.maximum(l0, l1), l2)                           # (1, TB), VALU only
    e = jnp.exp(logits - m)                                            # (3, TB)
    s = e[0:1, :] + e[1:2, :] + e[2:3, :]                              # (1, TB), VALU only
    inv = pl.reciprocal(s, approx=True)                                # EUP vrcp
    inv = inv * (2.0 - s * inv)                                        # Newton step 1
    inv = inv * (2.0 - s * inv)                                        # Newton step 2 (~exact)
    out_ref[...] = e * inv                                             # lane-dense store


def init_params(key):
    """Deterministic parameter init mirroring nn.Linear / nn.BatchNorm1d shapes."""
    def linear(key, fan_in, fan_out):
        kw, kb = jax.random.split(key)
        bound = 1.0 / jnp.sqrt(float(fan_in))
        w = jax.random.uniform(kw, (fan_in, fan_out), jnp.float32, -bound, bound)
        b = jax.random.uniform(kb, (1, fan_out), jnp.float32, -bound, bound)
        return w, b

    k1, k2, k3 = jax.random.split(key, 3)
    w1, b1 = linear(k1, 6, 32)
    w2, b2 = linear(k2, 32, 64)
    w3, b3 = linear(k3, 64, 3)

    def bn(features):
        return (
            jnp.ones((1, features), jnp.float32),    # gamma (weight)
            jnp.zeros((1, features), jnp.float32),   # beta (bias)
            jnp.zeros((1, features), jnp.float32),   # running_mean
            jnp.ones((1, features), jnp.float32),    # running_var
        )

    g1, be1, m1, v1 = bn(32)
    g2, be2, m2, v2 = bn(64)

    return (w1, b1, g1, be1, m1, v1,
            w2, b2, g2, be2, m2, v2,
            w3, b3)


def _prepare_kernel_params(params):
    """Fold eval-mode BN1 into (w2,b2), BN2 into (w3,b3); transpose to feature-major."""
    (w1, b1, g1, be1, m1, v1,
     w2, b2, g2, be2, m2, v2,
     w3, b3) = params

    # BN(x) = x*s + t  with  s = gamma*rsqrt(var+eps), t = beta - mean*s
    s1 = g1 * lax.rsqrt(v1 + BN_EPS)          # (1, 32)
    t1 = be1 - m1 * s1                        # (1, 32)
    s2 = g2 * lax.rsqrt(v2 + BN_EPS)          # (1, 64)
    t2 = be2 - m2 * s2                        # (1, 64)

    # (h*s + t) @ W + b  ==  h @ (s^T * W) + (t @ W + b)
    w2f = w2 * s1.reshape(-1, 1)              # (32, 64)
    b2f = b2 + t1 @ w2                        # (1, 64)
    w3f = w3 * s2.reshape(-1, 1)              # (64, 3)
    b3f = b3 + t2 @ w3                        # (1, 3)

    # Transpose to (out_features, in_features) weights and (out_features, 1) biases.
    return (w1.T, b1.T, w2f.T, b2f.T, w3f.T, b3f.T)


_TB_MAX = 2048   # batch-tile lanes; VMEM per step at 2048 is well under limits on all gens


def _batch_tile(B):
    """Static (trace-time) batch-tile choice: lane-aligned, even tile count for v7x."""
    if B <= _TB_MAX:
        return B                               # single tile, full extent (any B allowed)
    n_tiles = 2 * (-(-B // (2 * _TB_MAX)))     # even number of tiles >= 2 (megacore balance)
    tb = -(-B // n_tiles)
    tb = (-(-tb // 128)) * 128                 # batch is the lane dim -> multiple of 128
    return tb


@jax.jit
def meta_classifier_section(x, params):
    w1t, b1c, w2t, b2c, w3t, b3c = _prepare_kernel_params(params)   # trace-time fold

    B, _ = x.shape
    xt = x.T                                   # (6, B): batch-in-lanes layout
    tb = _batch_tile(B)
    grid = (pl.cdiv(B, tb),)

    def const_spec(a):
        return pl.BlockSpec(a.shape, lambda i: (0, 0))   # resident across all tiles

    out_t = pl.pallas_call(
        meta_classifier_kernel,
        out_shape=jax.ShapeDtypeStruct((3, B), jnp.float32),
        grid=grid,
        in_specs=[
            pl.BlockSpec((6, tb), lambda i: (0, i)),     # x^T: tiled over batch lanes
            const_spec(w1t), const_spec(b1c),
            const_spec(w2t), const_spec(b2c),
            const_spec(w3t), const_spec(b3c),
        ],
        out_specs=pl.BlockSpec((3, tb), lambda i: (0, i)),
        compiler_params=pltpu.CompilerParams(
            dimension_semantics=("parallel",),
        ),
    )(xt, w1t, b1c, w2t, b2c, w3t, b3c)

    return out_t.T                              # (B, 3)


def _reference(x, params):
    (w1, b1, g1, be1, m1, v1,
     w2, b2, g2, be2, m2, v2,
     w3, b3) = params
    h = _bn_eval(_gelu_exact(x @ w1 + b1), g1, be1, m1, v1)
    h = _bn_eval(_gelu_exact(h @ w2 + b2), g2, be2, m2, v2)
    logits = h @ w3 + b3
    return jax.nn.softmax(logits, axis=1)


if __name__ == "__main__":
    key = jax.random.PRNGKey(0)
    kx, kp, kx2 = jax.random.split(key, 3)

    params = init_params(kp)

    # Small check (single grid step, full-extent tile).
    B = 8
    x = jax.random.normal(kx, (B, 6), jnp.float32)
    out = meta_classifier_section(x, params)
    jax.block_until_ready(out)
    ref = _reference(x, params)
    assert out.shape == (B, 3)
    assert jnp.allclose(out, ref, atol=1e-5, rtol=1e-5), "mismatch vs reference (B=8)"
    assert jnp.allclose(jnp.sum(out, axis=1), 1.0, atol=1e-5), "softmax rows must sum to 1"

    # Larger check exercising multiple batch tiles (even tile count, partial last tile).
    B2 = 2112   # > _TB_MAX -> tb=1152, grid=(2,): tiles of 1152 and 960 (masked edge)
    x2 = jax.random.normal(kx2, (B2, 6), jnp.float32)
    out2 = meta_classifier_section(x2, params)
    jax.block_until_ready(out2)
    ref2 = _reference(x2, params)
    assert out2.shape == (B2, 3)
    assert jnp.allclose(out2, ref2, atol=1e-5, rtol=1e-5), "mismatch vs reference (B=2112)"
    assert jnp.allclose(jnp.sum(out2, axis=1), 1.0, atol=1e-5), "softmax rows must sum to 1"

    print("KERNEL_OK")
</pallas_src>

<mosaic_0001>
module attributes {stable_mosaic.version = 11 : i64} {
  func.func @meta_classifier_kernel(%arg0: i32, %arg1: memref<6x8xf32, #tpu.memory_space<vmem>>, %arg2: memref<32x6xf32, #tpu.memory_space<vmem>>, %arg3: memref<32x1xf32, #tpu.memory_space<vmem>>, %arg4: memref<64x32xf32, #tpu.memory_space<vmem>>, %arg5: memref<64x1xf32, #tpu.memory_space<vmem>>, %arg6: memref<3x64xf32, #tpu.memory_space<vmem>>, %arg7: memref<3x1xf32, #tpu.memory_space<vmem>>, %arg8: memref<3x8xf32, #tpu.memory_space<vmem>>) attributes {dimension_semantics = [#tpu.dimension_semantics<parallel>], iteration_bounds = array<i64: 1>, scalar_prefetch = 0 : i64, scratch_operands = 0 : i64, tpu.core_type = #tpu.core_type<tc>, window_params = [{transform_indices = @transform_0, window_bounds = array<i64: 6, 8>}, {pipeline_mode = #tpu.pipeline_mode<synchronous>, transform_indices = @transform_1, window_bounds = array<i64: 32, 6>}, {pipeline_mode = #tpu.pipeline_mode<synchronous>, transform_indices = @transform_2, window_bounds = array<i64: 32, 1>}, {pipeline_mode = #tpu.pipeline_mode<synchronous>, transform_indices = @transform_3, window_bounds = array<i64: 64, 32>}, {pipeline_mode = #tpu.pipeline_mode<synchronous>, transform_indices = @transform_4, window_bounds = array<i64: 64, 1>}, {pipeline_mode = #tpu.pipeline_mode<synchronous>, transform_indices = @transform_5, window_bounds = array<i64: 3, 64>}, {pipeline_mode = #tpu.pipeline_mode<synchronous>, transform_indices = @transform_6, window_bounds = array<i64: 3, 1>}, {transform_indices = @transform_7, window_bounds = array<i64: 3, 8>}]} {
    %c0 = arith.constant 0 : index
    %c0_0 = arith.constant 0 : index
    %0 = vector.load %arg1[%c0, %c0_0] : memref<6x8xf32, #tpu.memory_space<vmem>>, vector<6x8xf32>
    %c0_1 = arith.constant 0 : index
    %c0_2 = arith.constant 0 : index
    %1 = vector.load %arg2[%c0_1, %c0_2] : memref<32x6xf32, #tpu.memory_space<vmem>>, vector<32x6xf32>
    %cst = arith.constant dense<0.000000e+00> : vector<32x8xf32>
    %2 = tpu.matmul %1, %0, %cst {dimension_numbers = #tpu.dot_dimension_numbers<[1], [0], [0], [1], [0, 0, 1, 1], [], []>} : vector<32x6xf32>, vector<6x8xf32>, vector<32x8xf32> -> vector<32x8xf32>
    %c0_3 = arith.constant 0 : index
    %c0_4 = arith.constant 0 : index
    %3 = vector.load %arg3[%c0_3, %c0_4] : memref<32x1xf32, #tpu.memory_space<vmem>>, vector<32x1xf32>
    %4 = vector.broadcast %3 : vector<32x1xf32> to vector<32x8xf32>
    %5 = arith.addf %2, %4 : vector<32x8xf32>
    %cst_5 = arith.constant 5.000000e-01 : f32
    %6 = vector.broadcast %cst_5 : f32 to vector<32x8xf32>
    %7 = arith.mulf %6, %5 : vector<32x8xf32>
    %cst_6 = arith.constant 0.707106769 : f32
    %8 = vector.broadcast %cst_6 : f32 to vector<32x8xf32>
    %9 = arith.mulf %5, %8 : vector<32x8xf32>
    %10 = math.erf %9 : vector<32x8xf32>
    %cst_7 = arith.constant 1.000000e+00 : f32
    %11 = vector.broadcast %cst_7 : f32 to vector<32x8xf32>
    %12 = arith.addf %11, %10 : vector<32x8xf32>
    %13 = arith.mulf %7, %12 : vector<32x8xf32>
    %c0_8 = arith.constant 0 : index
    %c0_9 = arith.constant 0 : index
    %14 = vector.load %arg4[%c0_8, %c0_9] : memref<64x32xf32, #tpu.memory_space<vmem>>, vector<64x32xf32>
    %cst_10 = arith.constant dense<0.000000e+00> : vector<64x8xf32>
    %15 = tpu.matmul %14, %13, %cst_10 {dimension_numbers = #tpu.dot_dimension_numbers<[1], [0], [0], [1], [0, 0, 1, 1], [], []>} : vector<64x32xf32>, vector<32x8xf32>, vector<64x8xf32> -> vector<64x8xf32>
    %c0_11 = arith.constant 0 : index
    %c0_12 = arith.constant 0 : index
    %16 = vector.load %arg5[%c0_11, %c0_12] : memref<64x1xf32, #tpu.memory_space<vmem>>, vector<64x1xf32>
    %17 = vector.broadcast %16 : vector<64x1xf32> to vector<64x8xf32>
    %18 = arith.addf %15, %17 : vector<64x8xf32>
    %cst_13 = arith.constant 5.000000e-01 : f32
    %19 = vector.broadcast %cst_13 : f32 to vector<64x8xf32>
    %20 = arith.mulf %19, %18 : vector<64x8xf32>
    %cst_14 = arith.constant 0.707106769 : f32
    %21 = vector.broadcast %cst_14 : f32 to vector<64x8xf32>
    %22 = arith.mulf %18, %21 : vector<64x8xf32>
    %23 = math.erf %22 : vector<64x8xf32>
    %cst_15 = arith.constant 1.000000e+00 : f32
    %24 = vector.broadcast %cst_15 : f32 to vector<64x8xf32>
    %25 = arith.addf %24, %23 : vector<64x8xf32>
    %26 = arith.mulf %20, %25 : vector<64x8xf32>
    %c0_16 = arith.constant 0 : index
    %c0_17 = arith.constant 0 : index
    %27 = vector.load %arg6[%c0_16, %c0_17] : memref<3x64xf32, #tpu.memory_space<vmem>>, vector<3x64xf32>
    %cst_18 = arith.constant dense<0.000000e+00> : vector<3x8xf32>
    %28 = tpu.matmul %27, %26, %cst_18 {dimension_numbers = #tpu.dot_dimension_numbers<[1], [0], [0], [1], [0, 0, 1, 1], [], []>} : vector<3x64xf32>, vector<64x8xf32>, vector<3x8xf32> -> vector<3x8xf32>
    %c0_19 = arith.constant 0 : index
    %c0_20 = arith.constant 0 : index
    %29 = vector.load %arg7[%c0_19, %c0_20] : memref<3x1xf32, #tpu.memory_space<vmem>>, vector<3x1xf32>
    %30 = vector.broadcast %29 : vector<3x1xf32> to vector<3x8xf32>
    %31 = arith.addf %28, %30 : vector<3x8xf32>
    %32 = vector.extract_strided_slice %31 {offsets = [0, 0], sizes = [1, 8], strides = [1, 1]} : vector<3x8xf32> to vector<1x8xf32>
    %33 = vector.extract_strided_slice %31 {offsets = [1, 0], sizes = [1, 8], strides = [1, 1]} : vector<3x8xf32> to vector<1x8xf32>
    %34 = vector.extract_strided_slice %31 {offsets = [2, 0], sizes = [1, 8], strides = [1, 1]} : vector<3x8xf32> to vector<1x8xf32>
    %35 = arith.maximumf %32, %33 : vector<1x8xf32>
    %36 = arith.maximumf %35, %34 : vector<1x8xf32>
    %37 = vector.broadcast %36 : vector<1x8xf32> to vector<3x8xf32>
    %38 = arith.subf %31, %37 : vector<3x8xf32>
    %39 = math.exp %38 : vector<3x8xf32>
    %40 = vector.extract_strided_slice %39 {offsets = [0, 0], sizes = [1, 8], strides = [1, 1]} : vector<3x8xf32> to vector<1x8xf32>
    %41 = vector.extract_strided_slice %39 {offsets = [1, 0], sizes = [1, 8], strides = [1, 1]} : vector<3x8xf32> to vector<1x8xf32>
    %42 = arith.addf %40, %41 : vector<1x8xf32>
    %43 = vector.extract_strided_slice %39 {offsets = [2, 0], sizes = [1, 8], strides = [1, 1]} : vector<3x8xf32> to vector<1x8xf32>
    %44 = arith.addf %42, %43 : vector<1x8xf32>
    %45 = tpu.reciprocal %44 {approx = true} : vector<1x8xf32> -> vector<1x8xf32>
    %46 = arith.mulf %44, %45 : vector<1x8xf32>
    %cst_21 = arith.constant 2.000000e+00 : f32
    %47 = vector.broadcast %cst_21 : f32 to vector<1x8xf32>
    %48 = arith.subf %47, %46 : vector<1x8xf32>
    %49 = arith.mulf %45, %48 : vector<1x8xf32>
    %50 = arith.mulf %44, %49 : vector<1x8xf32>
    %cst_22 = arith.constant 2.000000e+00 : f32
    %51 = vector.broadcast %cst_22 : f32 to vector<1x8xf32>
    %52 = arith.subf %51, %50 : vector<1x8xf32>
    %53 = arith.mulf %49, %52 : vector<1x8xf32>
    %54 = vector.broadcast %53 : vector<1x8xf32> to vector<3x8xf32>
    %55 = arith.mulf %39, %54 : vector<3x8xf32>
    %c0_23 = arith.constant 0 : index
    %c0_24 = arith.constant 0 : index
    %56 = vector.load %arg8[%c0_23, %c0_24] : memref<3x8xf32, #tpu.memory_space<vmem>>, vector<3x8xf32>
    tpu.vector_store %arg8[%c0_23, %c0_24], %55 {strides = array<i32>} : memref<3x8xf32, #tpu.memory_space<vmem>>, vector<3x8xf32>,
    return
  }
  func.func @transform_0(%arg0: i32) -> (i32, i32) {
    %c0_i32 = arith.constant 0 : i32
    %c0_i32_0 = arith.constant 0 : i32
    return %c0_i32, %arg0 : i32, i32
  }
  func.func @transform_1(%arg0: i32) -> (i32, i32) {
    %c0_i32 = arith.constant 0 : i32
    %c0_i32_0 = arith.constant 0 : i32
    %c0_i32_1 = arith.constant 0 : i32
    return %c0_i32, %c0_i32_0 : i32, i32
  }
  func.func @transform_2(%arg0: i32) -> (i32, i32) {
    %c0_i32 = arith.constant 0 : i32
    %c0_i32_0 = arith.constant 0 : i32
    %c0_i32_1 = arith.constant 0 : i32
    return %c0_i32, %c0_i32_0 : i32, i32
  }
  func.func @transform_3(%arg0: i32) -> (i32, i32) {
    %c0_i32 = arith.constant 0 : i32
    %c0_i32_0 = arith.constant 0 : i32
    %c0_i32_1 = arith.constant 0 : i32
    return %c0_i32, %c0_i32_0 : i32, i32
  }
  func.func @transform_4(%arg0: i32) -> (i32, i32) {
    %c0_i32 = arith.constant 0 : i32
    %c0_i32_0 = arith.constant 0 : i32
    %c0_i32_1 = arith.constant 0 : i32
    return %c0_i32, %c0_i32_0 : i32, i32
  }
  func.func @transform_5(%arg0: i32) -> (i32, i32) {
    %c0_i32 = arith.constant 0 : i32
    %c0_i32_0 = arith.constant 0 : i32
    %c0_i32_1 = arith.constant 0 : i32
    return %c0_i32, %c0_i32_0 : i32, i32
  }
  func.func @transform_6(%arg0: i32) -> (i32, i32) {
    %c0_i32 = arith.constant 0 : i32
    %c0_i32_0 = arith.constant 0 : i32
    %c0_i32_1 = arith.constant 0 : i32
    return %c0_i32, %c0_i32_0 : i32, i32
  }
  func.func @transform_7(%arg0: i32) -> (i32, i32) {
    %c0_i32 = arith.constant 0 : i32
    %c0_i32_0 = arith.constant 0 : i32
    return %c0_i32, %arg0 : i32, i32
  }
}

</mosaic_0001>

<llo_original>
// kernel: meta_classifier_section.1
$region0: #{meta_classifier_section.1}
  #allocation0 [shape = 'u32[]', space=smem, size = 0x4, offset = 0x4, fixed_abs, tag = 'smem constant byte address 0x4 - core index']
  #allocation1 [shape = 'u32[72,128]{1,0:T(1,128)}', space=vmem, size = 0x9000, scoped, tag = 'internal scratch']
  %s0 = inlined_call_operand.vmem [shape: f32[6,8], index: 0, kind: input, shape index: {}]
  %s1 = inlined_call_operand.vmem [shape: f32[32,6], index: 1, kind: input, shape index: {}]
  %s2 = inlined_call_operand.vmem [shape: f32[32,1], index: 2, kind: input, shape index: {}]
  %s3 = inlined_call_operand.vmem [shape: f32[64,32], index: 3, kind: input, shape index: {}]
  %s4 = inlined_call_operand.vmem [shape: f32[64,1], index: 4, kind: input, shape index: {}]
  %s5 = inlined_call_operand.vmem [shape: f32[3,64], index: 5, kind: input, shape index: {}]
  %s6 = inlined_call_operand.vmem [shape: f32[3,1], index: 6, kind: input, shape index: {}]
  %s7 = inlined_call_operand.hbm [shape: f32[3,8], index: 7, kind: output, shape index: {}]
  %s8 = sld [smem:[#allocation0]]
  $region38: #{meta_classifier_section.1} parent=0
    _
  %s10 = ssub.s32 1, %s8
  %s11 = scalar_select 0, %s10, %s8
  $region1: #{meta_classifier_section.1} parent=0
    #allocation2 [shape = 'u8[2048]{0}', space=vmem, size = 0x800, scoped, tag = 'output window, operand 0, single buffered']
    #allocation3 [shape = 's32[1]{0}', space=sflag, size = 0x4, scoped, tag = 'scoped memory for meta_classifier_section.1']
    %12 = vsyncpa [#allocation3], 0
    // Predicated region
    $region2: #{meta_classifier_section.1} parent=1 // pred_check
      _
    $region3: #{meta_classifier_section.1} parent=1 // pred_check_branch
      %14 = sbr.rel (0) target = $region5
    $region4: #{meta_classifier_section.1} parent=1 // pred_region
      _
    $region5: #{meta_classifier_section.1} parent=1 // pred_fallthru
      _
    // Predicated region
    $region6: #{meta_classifier_section.1} parent=1 // pred_check
      _
    $region7: #{meta_classifier_section.1} parent=1 // pred_check_branch
      %16 = sbr.rel (0) target = $region9
    $region8: #{meta_classifier_section.1} parent=1 // pred_region
      _
    $region9: #{meta_classifier_section.1} parent=1 // pred_fallthru
      _
    // Predicated region
    $region10: #{meta_classifier_section.1} parent=1 // pred_check
      _
    $region11: #{meta_classifier_section.1} parent=1 // pred_check_branch
      %18 = sbr.rel (0) target = $region13
    $region12: #{meta_classifier_section.1} parent=1 // pred_region
      _
    $region13: #{meta_classifier_section.1} parent=1 // pred_fallthru
      _
    // Predicated region
    $region14: #{meta_classifier_section.1} parent=1 // pred_check
      _
    $region15: #{meta_classifier_section.1} parent=1 // pred_check_branch
      %20 = sbr.rel (0) target = $region17
    $region16: #{meta_classifier_section.1} parent=1 // pred_region
      _
    $region17: #{meta_classifier_section.1} parent=1 // pred_fallthru
      _
    // Predicated region
    $region18: #{meta_classifier_section.1} parent=1 // pred_check
      _
    $region19: #{meta_classifier_section.1} parent=1 // pred_check_branch
      %22 = sbr.rel (0) target = $region21
    $region20: #{meta_classifier_section.1} parent=1 // pred_region
      _
    $region21: #{meta_classifier_section.1} parent=1 // pred_fallthru
      _
    // Predicated region
    $region22: #{meta_classifier_section.1} parent=1 // pred_check
      _
    $region23: #{meta_classifier_section.1} parent=1 // pred_check_branch
      %24 = sbr.rel (0) target = $region25
    $region24: #{meta_classifier_section.1} parent=1 // pred_region
      _
    $region25: #{meta_classifier_section.1} parent=1 // pred_fallthru
      _
    // Predicated region
    $region26: #{meta_classifier_section.1} parent=1 // pred_check
      _
    $region27: #{meta_classifier_section.1} parent=1 // pred_check_branch
      %26 = sbr.rel (0) target = $region29
    $region28: #{meta_classifier_section.1} parent=1 // pred_region
      _
    $region29: #{meta_classifier_section.1} parent=1 // pred_fallthru
      _
    %v27 = vld [vmem:[%s0] sm:$0x3f]
    %v28 = vld [vmem:[%s1] sm:$0xff]
    %v29 = vld [vmem:[%s1 + $0x8] sm:$0xff]
    %v30 = vld [vmem:[%s1 + $0x10] sm:$0xff]
    %v31 = vld [vmem:[%s1 + $0x18] sm:$0xff]
    %v32 = vld [vmem:[%s2] sm:$0xff]
    %v33 = vld [vmem:[%s2 + $0x8] sm:$0xff]
    %v34 = vld [vmem:[%s2 + $0x10] sm:$0xff]
    %v35 = vld [vmem:[%s2 + $0x18] sm:$0xff]
    %37 = vset.pattern.permute.xlu0 0
    %38 = vperm.xlu0 %37, %v32
    %v39 = vpop.permute.xlu0 %38
    %42 = vset.pattern.permute.xlu0 0
    %43 = vperm.xlu0 %42, %v33
    %v44 = vpop.permute.xlu0 %43
    %47 = vset.pattern.permute.xlu0 0
    %48 = vperm.xlu0 %47, %v34
    %v49 = vpop.permute.xlu0 %48
    %52 = vset.pattern.permute.xlu0 0
    %53 = vperm.xlu0 %52, %v35
    %v54 = vpop.permute.xlu0 %53
    %vm56 = vcmask 48128
    %v58 = vsel %vm56, %v28, 0
    %v61 = vsel %vm56, %v29, 0
    %v64 = vsel %vm56, %v30, 0
    %v67 = vsel %vm56, %v31, 0
    %vm69 = vcmask 1045504
    %v71 = vsel %vm69, %v27, 0
    %73 = vmatpush.msra.mxu0 0.0
    %74 = vmatpush.msra.mxu0 0.0
    %75 = vmatpush.msra.mxu0 0.0
    %76 = vmatpush.msra.mxu0 0.0
    %77 = vmatpush.msra.mxu0 0.0
    %78 = vmatpush.msra.mxu0 0.0
    %79 = vmatpush.msra.mxu0 0.0
    %80 = vmatpush.msra.mxu0 0.0
    %81 = vmatpush.msra.mxu0 0.0
    %82 = vmatpush.msra.mxu0 0.0
    %83 = vmatpush.msra.mxu0 0.0
    %84 = vmatpush.msra.mxu0 0.0
    %85 = vmatpush.msra.mxu0 0.0
    %86 = vmatpush.msra.mxu0 0.0
    %87 = vmatpush.msra.mxu0 0.0
    %88 = vmatpush.msra.mxu0 %v71
    %89 = vmatmul.f32.gmra.mxu0 %v58
    %v90 = vpop.f32.mrf.mxu0
    %v91 = vadd.f32 %v39, %v90
    %92 = vmatmul.f32.gmra.mxu0 %v61
    %v93 = vpop.f32.mrf.mxu0
    %v94 = vadd.f32 %v44, %v93
    %95 = vmatmul.f32.gmra.mxu0 %v64
    %v96 = vpop.f32.mrf.mxu0
    %v97 = vadd.f32 %v49, %v96
    %98 = vmatmul.f32.gmra.mxu0 %v67
    %v99 = vpop.f32.mrf.mxu0
    %v100 = vadd.f32 %v54, %v99
    %101 = vdwg.mxu0
    %v102 = vmul.f32 %v91, 0.5
    %v103 = vmul.f32 %v94, 0.5
    %v104 = vmul.f32 %v97, 0.5
    %v105 = vmul.f32 %v100, 0.5
    %v106 = vmul.f32 %v91, 0.70710677
    %v107 = vmul.f32 %v94, 0.70710677
    %v108 = vmul.f32 %v97, 0.70710677
    %v109 = vmul.f32 %v100, 0.70710677
    %v110 = vmul.f32 %v106, %v106
    %v111 = vmin.f32 16.0, %v110
    %v112 = vmul.f32 %v111, 2.1237322e-06
    %v113 = vadd.f32 %v112, 0.00028619796
    %v114 = vmul.f32 %v111, %v113
    %v115 = vadd.f32 %v114, 0.0036580483
    %v116 = vmul.f32 %v111, %v115
    %v117 = vadd.f32 %v116, 0.05243302
    %v118 = vmul.f32 %v111, %v117
    %v119 = vadd.f32 %v118, 0.18741608
    %v120 = vmul.f32 %v111, %v119
    %v121 = vadd.f32 %v120, 1.1283791
    %v122 = vmul.f32 %v106, %v121
    %v123 = vmul.f32 %v111, 3.8918573e-05
    %v124 = vadd.f32 %v123, 0.001143296
    %v125 = vmul.f32 %v111, %v124
    %v126 = vadd.f32 %v125, 0.014752088
    %v127 = vmul.f32 %v111, %v126
    %v128 = vadd.f32 %v127, 0.112945676
    %v129 = vmul.f32 %v111, %v128
    %v130 = vadd.f32 %v129, 0.4994258
    %v131 = vmul.f32 %v111, %v130
    %v132 = vadd.f32 %v131, 1.0
    %v133 = vrcp.pop %v132
    %v134 = vmul.f32 %v132, %v133
    %v135 = vsub.f32 1.0, %v134
    %v136 = vmul.f32 %v133, %v135
    %v137 = vadd.f32 %v133, %v136
    %vm138 = vweird.f32 %v132
    %vm139 = vweird.f32 %v133
    %vm140 = vmor %vm138, %vm139
    %v141 = vsel %vm140, %v133, %v137
    %v142 = vand.u32 2147483647, %v132
    %vm143 = vcmp.eq.f32.partialorder %v142, 8.507059e+37
    %v144 = vand.u32 %v132, 2147483648
    %v145 = vor.u32 1.1754944e-38, %v144
    %v146 = vsel %vm143, %v145, %v141
    %v147 = vmul.f32 %v122, %v146
    %v148 = vmin.f32 %v147, 1.0
    %v149 = vmax.f32 %v148, -1.0
    %v150 = vmul.f32 %v107, %v107
    %v151 = vmin.f32 16.0, %v150
    %v152 = vmul.f32 %v151, 2.1237322e-06
    %v153 = vadd.f32 %v152, 0.00028619796
    %v154 = vmul.f32 %v151, %v153
    %v155 = vadd.f32 %v154, 0.0036580483
    %v156 = vmul.f32 %v151, %v155
    %v157 = vadd.f32 %v156, 0.05243302
    %v158 = vmul.f32 %v151, %v157
    %v159 = vadd.f32 %v158, 0.18741608
    %v160 = vmul.f32 %v151, %v159
    %v161 = vadd.f32 %v160, 1.1283791
    %v162 = vmul.f32 %v107, %v161
    %v163 = vmul.f32 %v151, 3.8918573e-05
    %v164 = vadd.f32 %v163, 0.001143296
    %v165 = vmul.f32 %v151, %v164
    %v166 = vadd.f32 %v165, 0.014752088
    %v167 = vmul.f32 %v151, %v166
    %v168 = vadd.f32 %v167, 0.112945676
    %v169 = vmul.f32 %v151, %v168
    %v170 = vadd.f32 %v169, 0.4994258
    %v171 = vmul.f32 %v151, %v170
    %v172 = vadd.f32 %v171, 1.0
    %v173 = vrcp.pop %v172
    %v174 = vmul.f32 %v172, %v173
    %v175 = vsub.f32 1.0, %v174
    %v176 = vmul.f32 %v173, %v175
    %v177 = vadd.f32 %v173, %v176
    %vm178 = vweird.f32 %v172
    %vm179 = vweird.f32 %v173
    %vm180 = vmor %vm178, %vm179
    %v181 = vsel %vm180, %v173, %v177
    %v182 = vand.u32 2147483647, %v172
    %vm183 = vcmp.eq.f32.partialorder %v182, 8.507059e+37
    %v184 = vand.u32 %v172, 2147483648
    %v185 = vor.u32 1.1754944e-38, %v184
    %v186 = vsel %vm183, %v185, %v181
    %v187 = vmul.f32 %v162, %v186
    %v188 = vmin.f32 %v187, 1.0
    %v189 = vmax.f32 %v188, -1.0
    %v190 = vmul.f32 %v108, %v108
    %v191 = vmin.f32 16.0, %v190
    %v192 = vmul.f32 %v191, 2.1237322e-06
    %v193 = vadd.f32 %v192, 0.00028619796
    %v194 = vmul.f32 %v191, %v193
    %v195 = vadd.f32 %v194, 0.0036580483
    %v196 = vmul.f32 %v191, %v195
    %v197 = vadd.f32 %v196, 0.05243302
    %v198 = vmul.f32 %v191, %v197
    %v199 = vadd.f32 %v198, 0.18741608
    %v200 = vmul.f32 %v191, %v199
    %v201 = vadd.f32 %v200, 1.1283791
    %v202 = vmul.f32 %v108, %v201
    %v203 = vmul.f32 %v191, 3.8918573e-05
    %v204 = vadd.f32 %v203, 0.001143296
    %v205 = vmul.f32 %v191, %v204
    %v206 = vadd.f32 %v205, 0.014752088
    %v207 = vmul.f32 %v191, %v206
    %v208 = vadd.f32 %v207, 0.112945676
    %v209 = vmul.f32 %v191, %v208
    %v210 = vadd.f32 %v209, 0.4994258
    %v211 = vmul.f32 %v191, %v210
    %v212 = vadd.f32 %v211, 1.0
    %v213 = vrcp.pop %v212
    %v214 = vmul.f32 %v212, %v213
    %v215 = vsub.f32 1.0, %v214
    %v216 = vmul.f32 %v213, %v215
    %v217 = vadd.f32 %v213, %v216
    %vm218 = vweird.f32 %v212
    %vm219 = vweird.f32 %v213
    %vm220 = vmor %vm218, %vm219
    %v221 = vsel %vm220, %v213, %v217
    %v222 = vand.u32 2147483647, %v212
    %vm223 = vcmp.eq.f32.partialorder %v222, 8.507059e+37
    %v224 = vand.u32 %v212, 2147483648
    %v225 = vor.u32 1.1754944e-38, %v224
    %v226 = vsel %vm223, %v225, %v221
    %v227 = vmul.f32 %v202, %v226
    %v228 = vmin.f32 %v227, 1.0
    %v229 = vmax.f32 %v228, -1.0
    %v230 = vmul.f32 %v109, %v109
    %v231 = vmin.f32 16.0, %v230
    %v232 = vmul.f32 %v231, 2.1237322e-06
    %v233 = vadd.f32 %v232, 0.00028619796
    %v234 = vmul.f32 %v231, %v233
    %v235 = vadd.f32 %v234, 0.0036580483
    %v236 = vmul.f32 %v231, %v235
    %v237 = vadd.f32 %v236, 0.05243302
    %v238 = vmul.f32 %v231, %v237
    %v239 = vadd.f32 %v238, 0.18741608
    %v240 = vmul.f32 %v231, %v239
    %v241 = vadd.f32 %v240, 1.1283791
    %v242 = vmul.f32 %v109, %v241
    %v243 = vmul.f32 %v231, 3.8918573e-05
    %v244 = vadd.f32 %v243, 0.001143296
    %v245 = vmul.f32 %v231, %v244
    %v246 = vadd.f32 %v245, 0.014752088
    %v247 = vmul.f32 %v231, %v246
    %v248 = vadd.f32 %v247, 0.112945676
    %v249 = vmul.f32 %v231, %v248
    %v250 = vadd.f32 %v249, 0.4994258
    %v251 = vmul.f32 %v231, %v250
    %v252 = vadd.f32 %v251, 1.0
    %v253 = vrcp.pop %v252
    %v254 = vmul.f32 %v252, %v253
    %v255 = vsub.f32 1.0, %v254
    %v256 = vmul.f32 %v253, %v255
    %v257 = vadd.f32 %v253, %v256
    %vm258 = vweird.f32 %v252
    %vm259 = vweird.f32 %v253
    %vm260 = vmor %vm258, %vm259
    %v261 = vsel %vm260, %v253, %v257
    %v262 = vand.u32 2147483647, %v252
    %vm263 = vcmp.eq.f32.partialorder %v262, 8.507059e+37
    %v264 = vand.u32 %v252, 2147483648
    %v265 = vor.u32 1.1754944e-38, %v264
    %v266 = vsel %vm263, %v265, %v261
    %v267 = vmul.f32 %v242, %v266
    %v268 = vmin.f32 %v267, 1.0
    %v269 = vmax.f32 %v268, -1.0
    %v270 = vadd.f32 %v149, 1.0
    %v271 = vadd.f32 %v189, 1.0
    %v272 = vadd.f32 %v229, 1.0
    %v273 = vadd.f32 %v269, 1.0
    %v274 = vmul.f32 %v102, %v270
    %v275 = vmul.f32 %v103, %v271
    %v276 = vmul.f32 %v104, %v272
    %v277 = vmul.f32 %v105, %v273
    %v278 = vld [vmem:[%s3] sm:$0xff]
    %v279 = vld [vmem:[%s3 + $0x8] sm:$0xff]
    %v280 = vld [vmem:[%s3 + $0x10] sm:$0xff]
    %v281 = vld [vmem:[%s3 + $0x18] sm:$0xff]
    %v282 = vld [vmem:[%s3 + $0x20] sm:$0xff]
    %v283 = vld [vmem:[%s3 + $0x28] sm:$0xff]
    %v284 = vld [vmem:[%s3 + $0x30] sm:$0xff]
    %v285 = vld [vmem:[%s3 + $0x38] sm:$0xff]
    %v286 = vld [vmem:[%s4] sm:$0xff]
    %v287 = vld [vmem:[%s4 + $0x8] sm:$0xff]
    %v288 = vld [vmem:[%s4 + $0x10] sm:$0xff]
    %v289 = vld [vmem:[%s4 + $0x18] sm:$0xff]
    %v290 = vld [vmem:[%s4 + $0x20] sm:$0xff]
    %v291 = vld [vmem:[%s4 + $0x28] sm:$0xff]
    %v292 = vld [vmem:[%s4 + $0x30] sm:$0xff]
    %v293 = vld [vmem:[%s4 + $0x38] sm:$0xff]
    %295 = vset.pattern.permute.xlu0 0
    %296 = vperm.xlu0 %295, %v286
    %v297 = vpop.permute.xlu0 %296
    %300 = vset.pattern.permute.xlu0 0
    %301 = vperm.xlu0 %300, %v287
    %v302 = vpop.permute.xlu0 %301
    %305 = vset.pattern.permute.xlu0 0
    %306 = vperm.xlu0 %305, %v288
    %v307 = vpop.permute.xlu0 %306
    %310 = vset.pattern.permute.xlu0 0
    %311 = vperm.xlu0 %310, %v289
    %v312 = vpop.permute.xlu0 %311
    %315 = vset.pattern.permute.xlu0 0
    %316 = vperm.xlu0 %315, %v290
    %v317 = vpop.permute.xlu0 %316
    %320 = vset.pattern.permute.xlu0 0
    %321 = vperm.xlu0 %320, %v291
    %v322 = vpop.permute.xlu0 %321
    %325 = vset.pattern.permute.xlu0 0
    %326 = vperm.xlu0 %325, %v292
    %v327 = vpop.permute.xlu0 %326
    %330 = vset.pattern.permute.xlu0 0
    %331 = vperm.xlu0 %330, %v293
    %v332 = vpop.permute.xlu0 %331
    %vm334 = vcmask 261120
    %v336 = vsel %vm334, %v278, 0
    %v339 = vsel %vm334, %v279, 0
    %v342 = vsel %vm334, %v280, 0
    %v345 = vsel %vm334, %v281, 0
    %v348 = vsel %vm334, %v282, 0
    %v351 = vsel %vm334, %v283, 0
    %v354 = vsel %vm334, %v284, 0
    %v357 = vsel %vm334, %v285, 0
    %359 = vmatpush.msra.mxu0 0.0
    %360 = vmatpush.msra.mxu0 0.0
    %361 = vmatpush.msra.mxu0 0.0
    %362 = vmatpush.msra.mxu0 0.0
    %363 = vmatpush.msra.mxu0 0.0
    %364 = vmatpush.msra.mxu0 0.0
    %365 = vmatpush.msra.mxu0 0.0
    %366 = vmatpush.msra.mxu0 0.0
    %367 = vmatpush.msra.mxu0 0.0
    %368 = vmatpush.msra.mxu0 0.0
    %369 = vmatpush.msra.mxu0 0.0
    %370 = vmatpush.msra.mxu0 0.0
    %371 = vmatpush.msra.mxu0 %v277
    %372 = vmatpush.msra.mxu0 %v276
    %373 = vmatpush.msra.mxu0 %v275
    %374 = vmatpush.msra.mxu0 %v274
    %375 = vmatmul.f32.gmra.mxu0 %v336
    %v376 = vpop.f32.mrf.mxu0
    %v377 = vadd.f32 %v297, %v376
    %378 = vmatmul.f32.gmra.mxu0 %v339
    %v379 = vpop.f32.mrf.mxu0
    %v380 = vadd.f32 %v302, %v379
    %381 = vmatmul.f32.gmra.mxu0 %v342
    %v382 = vpop.f32.mrf.mxu0
    %v383 = vadd.f32 %v307, %v382
    %384 = vmatmul.f32.gmra.mxu0 %v345
    %v385 = vpop.f32.mrf.mxu0
    %v386 = vadd.f32 %v312, %v385
    %387 = vmatmul.f32.gmra.mxu0 %v348
    %v388 = vpop.f32.mrf.mxu0
    %v389 = vadd.f32 %v317, %v388
    %390 = vmatmul.f32.gmra.mxu0 %v351
    %v391 = vpop.f32.mrf.mxu0
    %v392 = vadd.f32 %v322, %v391
    %393 = vmatmul.f32.gmra.mxu0 %v354
    %v394 = vpop.f32.mrf.mxu0
    %v395 = vadd.f32 %v327, %v394
    %396 = vmatmul.f32.gmra.mxu0 %v357
    %v397 = vpop.f32.mrf.mxu0
    %v398 = vadd.f32 %v332, %v397
    %399 = vdwg.mxu0
    %v400 = vmul.f32 %v377, 0.5
    %v401 = vmul.f32 %v380, 0.5
    %v402 = vmul.f32 %v383, 0.5
    %v403 = vmul.f32 %v386, 0.5
    %v404 = vmul.f32 %v389, 0.5
    %v405 = vmul.f32 %v392, 0.5
    %v406 = vmul.f32 %v395, 0.5
    %v407 = vmul.f32 %v398, 0.5
    %v408 = vmul.f32 %v377, 0.70710677
    %v409 = vmul.f32 %v380, 0.70710677
    %v410 = vmul.f32 %v383, 0.70710677
    %v411 = vmul.f32 %v386, 0.70710677
    %v412 = vmul.f32 %v389, 0.70710677
    %v413 = vmul.f32 %v392, 0.70710677
    %v414 = vmul.f32 %v395, 0.70710677
    %v415 = vmul.f32 %v398, 0.70710677
    %v416 = vmul.f32 %v408, %v408
    %v417 = vmin.f32 16.0, %v416
    %v418 = vmul.f32 %v417, 2.1237322e-06
    %v419 = vadd.f32 %v418, 0.00028619796
    %v420 = vmul.f32 %v417, %v419
    %v421 = vadd.f32 %v420, 0.0036580483
    %v422 = vmul.f32 %v417, %v421
    %v423 = vadd.f32 %v422, 0.05243302
    %v424 = vmul.f32 %v417, %v423
    %v425 = vadd.f32 %v424, 0.18741608
    %v426 = vmul.f32 %v417, %v425
    %v427 = vadd.f32 %v426, 1.1283791
    %v428 = vmul.f32 %v408, %v427
    %v429 = vmul.f32 %v417, 3.8918573e-05
    %v430 = vadd.f32 %v429, 0.001143296
    %v431 = vmul.f32 %v417, %v430
    %v432 = vadd.f32 %v431, 0.014752088
    %v433 = vmul.f32 %v417, %v432
    %v434 = vadd.f32 %v433, 0.112945676
    %v435 = vmul.f32 %v417, %v434
    %v436 = vadd.f32 %v435, 0.4994258
    %v437 = vmul.f32 %v417, %v436
    %v438 = vadd.f32 %v437, 1.0
    %v439 = vrcp.pop %v438
    %v440 = vmul.f32 %v438, %v439
    %v441 = vsub.f32 1.0, %v440
    %v442 = vmul.f32 %v439, %v441
    %v443 = vadd.f32 %v439, %v442
    %vm444 = vweird.f32 %v438
    %vm445 = vweird.f32 %v439
    %vm446 = vmor %vm444, %vm445
    %v447 = vsel %vm446, %v439, %v443
    %v448 = vand.u32 2147483647, %v438
    %vm449 = vcmp.eq.f32.partialorder %v448, 8.507059e+37
    %v450 = vand.u32 %v438, 2147483648
    %v451 = vor.u32 1.1754944e-38, %v450
    %v452 = vsel %vm449, %v451, %v447
    %v453 = vmul.f32 %v428, %v452
    %v454 = vmin.f32 %v453, 1.0
    %v455 = vmax.f32 %v454, -1.0
    %v456 = vmul.f32 %v409, %v409
    %v457 = vmin.f32 16.0, %v456
    %v458 = vmul.f32 %v457, 2.1237322e-06
    %v459 = vadd.f32 %v458, 0.00028619796
    %v460 = vmul.f32 %v457, %v459
    %v461 = vadd.f32 %v460, 0.0036580483
    %v462 = vmul.f32 %v457, %v461
    %v463 = vadd.f32 %v462, 0.05243302
    %v464 = vmul.f32 %v457, %v463
    %v465 = vadd.f32 %v464, 0.18741608
    %v466 = vmul.f32 %v457, %v465
    %v467 = vadd.f32 %v466, 1.1283791
    %v468 = vmul.f32 %v409, %v467
    %v469 = vmul.f32 %v457, 3.8918573e-05
    %v470 = vadd.f32 %v469, 0.001143296
    %v471 = vmul.f32 %v457, %v470
    %v472 = vadd.f32 %v471, 0.014752088
    %v473 = vmul.f32 %v457, %v472
    %v474 = vadd.f32 %v473, 0.112945676
    %v475 = vmul.f32 %v457, %v474
    %v476 = vadd.f32 %v475, 0.4994258
    %v477 = vmul.f32 %v457, %v476
    %v478 = vadd.f32 %v477, 1.0
    %v479 = vrcp.pop %v478
    %v480 = vmul.f32 %v478, %v479
    %v481 = vsub.f32 1.0, %v480
    %v482 = vmul.f32 %v479, %v481
    %v483 = vadd.f32 %v479, %v482
    %vm484 = vweird.f32 %v478
    %vm485 = vweird.f32 %v479
    %vm486 = vmor %vm484, %vm485
    %v487 = vsel %vm486, %v479, %v483
    %v488 = vand.u32 2147483647, %v478
    %vm489 = vcmp.eq.f32.partialorder %v488, 8.507059e+37
    %v490 = vand.u32 %v478, 2147483648
    %v491 = vor.u32 1.1754944e-38, %v490
    %v492 = vsel %vm489, %v491, %v487
    %v493 = vmul.f32 %v468, %v492
    %v494 = vmin.f32 %v493, 1.0
    %v495 = vmax.f32 %v494, -1.0
    %v496 = vmul.f32 %v410, %v410
    %v497 = vmin.f32 16.0, %v496
    %v498 = vmul.f32 %v497, 2.1237322e-06
    %v499 = vadd.f32 %v498, 0.00028619796
    %v500 = vmul.f32 %v497, %v499
    %v501 = vadd.f32 %v500, 0.0036580483
    %v502 = vmul.f32 %v497, %v501
    %v503 = vadd.f32 %v502, 0.05243302
    %v504 = vmul.f32 %v497, %v503
    %v505 = vadd.f32 %v504, 0.18741608
    %v506 = vmul.f32 %v497, %v505
    %v507 = vadd.f32 %v506, 1.1283791
    %v508 = vmul.f32 %v410, %v507
    %v509 = vmul.f32 %v497, 3.8918573e-05
    %v510 = vadd.f32 %v509, 0.001143296
    %v511 = vmul.f32 %v497, %v510
    %v512 = vadd.f32 %v511, 0.014752088
    %v513 = vmul.f32 %v497, %v512
    %v514 = vadd.f32 %v513, 0.112945676
    %v515 = vmul.f32 %v497, %v514
    %v516 = vadd.f32 %v515, 0.4994258
    %v517 = vmul.f32 %v497, %v516
    %v518 = vadd.f32 %v517, 1.0
    %v519 = vrcp.pop %v518
    %v520 = vmul.f32 %v518, %v519
    %v521 = vsub.f32 1.0, %v520
    %v522 = vmul.f32 %v519, %v521
    %v523 = vadd.f32 %v519, %v522
    %vm524 = vweird.f32 %v518
    %vm525 = vweird.f32 %v519
    %vm526 = vmor %vm524, %vm525
    %v527 = vsel %vm526, %v519, %v523
    %v528 = vand.u32 2147483647, %v518
    %vm529 = vcmp.eq.f32.partialorder %v528, 8.507059e+37
    %v530 = vand.u32 %v518, 2147483648
    %v531 = vor.u32 1.1754944e-38, %v530
    %v532 = vsel %vm529, %v531, %v527
    %v533 = vmul.f32 %v508, %v532
    %v534 = vmin.f32 %v533, 1.0
    %v535 = vmax.f32 %v534, -1.0
    %v536 = vmul.f32 %v411, %v411
    %v537 = vmin.f32 16.0, %v536
    %v538 = vmul.f32 %v537, 2.1237322e-06
    %v539 = vadd.f32 %v538, 0.00028619796
    %v540 = vmul.f32 %v537, %v539
    %v541 = vadd.f32 %v540, 0.0036580483
    %v542 = vmul.f32 %v537, %v541
    %v543 = vadd.f32 %v542, 0.05243302
    %v544 = vmul.f32 %v537, %v543
    %v545 = vadd.f32 %v544, 0.18741608
    %v546 = vmul.f32 %v537, %v545
    %v547 = vadd.f32 %v546, 1.1283791
    %v548 = vmul.f32 %v411, %v547
    %v549 = vmul.f32 %v537, 3.8918573e-05
    %v550 = vadd.f32 %v549, 0.001143296
    %v551 = vmul.f32 %v537, %v550
    %v552 = vadd.f32 %v551, 0.014752088
    %v553 = vmul.f32 %v537, %v552
    %v554 = vadd.f32 %v553, 0.112945676
    %v555 = vmul.f32 %v537, %v554
    %v556 = vadd.f32 %v555, 0.4994258
    %v557 = vmul.f32 %v537, %v556
    %v558 = vadd.f32 %v557, 1.0
    %v559 = vrcp.pop %v558
    %v560 = vmul.f32 %v558, %v559
    %v561 = vsub.f32 1.0, %v560
    %v562 = vmul.f32 %v559, %v561
    %v563 = vadd.f32 %v559, %v562
    %vm564 = vweird.f32 %v558
    %vm565 = vweird.f32 %v559
    %vm566 = vmor %vm564, %vm565
    %v567 = vsel %vm566, %v559, %v563
    %v568 = vand.u32 2147483647, %v558
    %vm569 = vcmp.eq.f32.partialorder %v568, 8.507059e+37
    %v570 = vand.u32 %v558, 2147483648
    %v571 = vor.u32 1.1754944e-38, %v570
    %v572 = vsel %vm569, %v571, %v567
    %v573 = vmul.f32 %v548, %v572
    %v574 = vmin.f32 %v573, 1.0
    %v575 = vmax.f32 %v574, -1.0
    %v576 = vmul.f32 %v412, %v412
    %v577 = vmin.f32 16.0, %v576
    %v578 = vmul.f32 %v577, 2.1237322e-06
    %v579 = vadd.f32 %v578, 0.00028619796
    %v580 = vmul.f32 %v577, %v579
    %v581 = vadd.f32 %v580, 0.0036580483
    %v582 = vmul.f32 %v577, %v581
    %v583 = vadd.f32 %v582, 0.05243302
    %v584 = vmul.f32 %v577, %v583
    %v585 = vadd.f32 %v584, 0.18741608
    %v586 = vmul.f32 %v577, %v585
    %v587 = vadd.f32 %v586, 1.1283791
    %v588 = vmul.f32 %v412, %v587
    %v589 = vmul.f32 %v577, 3.8918573e-05
    %v590 = vadd.f32 %v589, 0.001143296
    %v591 = vmul.f32 %v577, %v590
    %v592 = vadd.f32 %v591, 0.014752088
    %v593 = vmul.f32 %v577, %v592
    %v594 = vadd.f32 %v593, 0.112945676
    %v595 = vmul.f32 %v577, %v594
    %v596 = vadd.f32 %v595, 0.4994258
    %v597 = vmul.f32 %v577, %v596
    %v598 = vadd.f32 %v597, 1.0
    %v599 = vrcp.pop %v598
    %v600 = vmul.f32 %v598, %v599
    %v601 = vsub.f32 1.0, %v600
    %v602 = vmul.f32 %v599, %v601
    %v603 = vadd.f32 %v599, %v602
    %vm604 = vweird.f32 %v598
    %vm605 = vweird.f32 %v599
    %vm606 = vmor %vm604, %vm605
    %v607 = vsel %vm606, %v599, %v603
    %v608 = vand.u32 2147483647, %v598
    %vm609 = vcmp.eq.f32.partialorder %v608, 8.507059e+37
    %v610 = vand.u32 %v598, 2147483648
    %v611 = vor.u32 1.1754944e-38, %v610
    %v612 = vsel %vm609, %v611, %v607
    %v613 = vmul.f32 %v588, %v612
    %v614 = vmin.f32 %v613, 1.0
    %v615 = vmax.f32 %v614, -1.0
    %v616 = vmul.f32 %v413, %v413
    %v617 = vmin.f32 16.0, %v616
    %v618 = vmul.f32 %v617, 2.1237322e-06
    %v619 = vadd.f32 %v618, 0.00028619796
    %v620 = vmul.f32 %v617, %v619
    %v621 = vadd.f32 %v620, 0.0036580483
    %v622 = vmul.f32 %v617, %v621
    %v623 = vadd.f32 %v622, 0.05243302
    %v624 = vmul.f32 %v617, %v623
    %v625 = vadd.f32 %v624, 0.18741608
    %v626 = vmul.f32 %v617, %v625
    %v627 = vadd.f32 %v626, 1.1283791
    %v628 = vmul.f32 %v413, %v627
    %v629 = vmul.f32 %v617, 3.8918573e-05
    %v630 = vadd.f32 %v629, 0.001143296
    %v631 = vmul.f32 %v617, %v630
    %v632 = vadd.f32 %v631, 0.014752088
    %v633 = vmul.f32 %v617, %v632
    %v634 = vadd.f32 %v633, 0.112945676
    %v635 = vmul.f32 %v617, %v634
    %v636 = vadd.f32 %v635, 0.4994258
    %v637 = vmul.f32 %v617, %v636
    %v638 = vadd.f32 %v637, 1.0
    %v639 = vrcp.pop %v638
    %v640 = vmul.f32 %v638, %v639
    %v641 = vsub.f32 1.0, %v640
    %v642 = vmul.f32 %v639, %v641
    %v643 = vadd.f32 %v639, %v642
    %vm644 = vweird.f32 %v638
    %vm645 = vweird.f32 %v639
    %vm646 = vmor %vm644, %vm645
    %v647 = vsel %vm646, %v639, %v643
    %v648 = vand.u32 2147483647, %v638
    %vm649 = vcmp.eq.f32.partialorder %v648, 8.507059e+37
    %v650 = vand.u32 %v638, 2147483648
    %v651 = vor.u32 1.1754944e-38, %v650
    %v652 = vsel %vm649, %v651, %v647
    %v653 = vmul.f32 %v628, %v652
    %v654 = vmin.f32 %v653, 1.0
    %v655 = vmax.f32 %v654, -1.0
    %v656 = vmul.f32 %v414, %v414
    %v657 = vmin.f32 16.0, %v656
    %v658 = vmul.f32 %v657, 2.1237322e-06
    %v659 = vadd.f32 %v658, 0.00028619796
    %v660 = vmul.f32 %v657, %v659
    %v661 = vadd.f32 %v660, 0.0036580483
    %v662 = vmul.f32 %v657, %v661
    %v663 = vadd.f32 %v662, 0.05243302
    %v664 = vmul.f32 %v657, %v663
    %v665 = vadd.f32 %v664, 0.18741608
    %v666 = vmul.f32 %v657, %v665
    %v667 = vadd.f32 %v666, 1.1283791
    %v668 = vmul.f32 %v414, %v667
    %v669 = vmul.f32 %v657, 3.8918573e-05
    %v670 = vadd.f32 %v669, 0.001143296
    %v671 = vmul.f32 %v657, %v670
    %v672 = vadd.f32 %v671, 0.014752088
    %v673 = vmul.f32 %v657, %v672
    %v674 = vadd.f32 %v673, 0.112945676
    %v675 = vmul.f32 %v657, %v674
    %v676 = vadd.f32 %v675, 0.4994258
    %v677 = vmul.f32 %v657, %v676
    %v678 = vadd.f32 %v677, 1.0
    %v679 = vrcp.pop %v678
    %v680 = vmul.f32 %v678, %v679
    %v681 = vsub.f32 1.0, %v680
    %v682 = vmul.f32 %v679, %v681
    %v683 = vadd.f32 %v679, %v682
    %vm684 = vweird.f32 %v678
    %vm685 = vweird.f32 %v679
    %vm686 = vmor %vm684, %vm685
    %v687 = vsel %vm686, %v679, %v683
    %v688 = vand.u32 2147483647, %v678
    %vm689 = vcmp.eq.f32.partialorder %v688, 8.507059e+37
    %v690 = vand.u32 %v678, 2147483648
    %v691 = vor.u32 1.1754944e-38, %v690
    %v692 = vsel %vm689, %v691, %v687
    %v693 = vmul.f32 %v668, %v692
    %v694 = vmin.f32 %v693, 1.0
    %v695 = vmax.f32 %v694, -1.0
    %v696 = vmul.f32 %v415, %v415
    %v697 = vmin.f32 16.0, %v696
    %v698 = vmul.f32 %v697, 2.1237322e-06
    %v699 = vadd.f32 %v698, 0.00028619796
    %v700 = vmul.f32 %v697, %v699
    %v701 = vadd.f32 %v700, 0.0036580483
    %v702 = vmul.f32 %v697, %v701
    %v703 = vadd.f32 %v702, 0.05243302
    %v704 = vmul.f32 %v697, %v703
    %v705 = vadd.f32 %v704, 0.18741608
    %v706 = vmul.f32 %v697, %v705
    %v707 = vadd.f32 %v706, 1.1283791
    %v708 = vmul.f32 %v415, %v707
    %v709 = vmul.f32 %v697, 3.8918573e-05
    %v710 = vadd.f32 %v709, 0.001143296
    %v711 = vmul.f32 %v697, %v710
    %v712 = vadd.f32 %v711, 0.014752088
    %v713 = vmul.f32 %v697, %v712
    %v714 = vadd.f32 %v713, 0.112945676
    %v715 = vmul.f32 %v697, %v714
    %v716 = vadd.f32 %v715, 0.4994258
    %v717 = vmul.f32 %v697, %v716
    %v718 = vadd.f32 %v717, 1.0
    %v719 = vrcp.pop %v718
    %v720 = vmul.f32 %v718, %v719
    %v721 = vsub.f32 1.0, %v720
    %v722 = vmul.f32 %v719, %v721
    %v723 = vadd.f32 %v719, %v722
    %vm724 = vweird.f32 %v718
    %vm725 = vweird.f32 %v719
    %vm726 = vmor %vm724, %vm725
    %v727 = vsel %vm726, %v719, %v723
    %v728 = vand.u32 2147483647, %v718
    %vm729 = vcmp.eq.f32.partialorder %v728, 8.507059e+37
    %v730 = vand.u32 %v718, 2147483648
    %v731 = vor.u32 1.1754944e-38, %v730
    %v732 = vsel %vm729, %v731, %v727
    %v733 = vmul.f32 %v708, %v732
    %v734 = vmin.f32 %v733, 1.0
    %v735 = vmax.f32 %v734, -1.0
    %v736 = vadd.f32 %v455, 1.0
    %v737 = vadd.f32 %v495, 1.0
    %v738 = vadd.f32 %v535, 1.0
    %v739 = vadd.f32 %v575, 1.0
    %v740 = vadd.f32 %v615, 1.0
    %v741 = vadd.f32 %v655, 1.0
    %v742 = vadd.f32 %v695, 1.0
    %v743 = vadd.f32 %v735, 1.0
    %v744 = vmul.f32 %v400, %v736
    %v745 = vmul.f32 %v401, %v737
    %v746 = vmul.f32 %v402, %v738
    %v747 = vmul.f32 %v403, %v739
    %v748 = vmul.f32 %v404, %v740
    %v749 = vmul.f32 %v405, %v741
    %v750 = vmul.f32 %v406, %v742
    %v751 = vmul.f32 %v407, %v743
    %v752 = vld [vmem:[%s5] sm:$0x7]
    %v753 = vld [vmem:[%s6] sm:$0x7]
    %755 = vset.pattern.permute.xlu0 0
    %756 = vperm.xlu0 %755, %v753
    %v757 = vpop.permute.xlu0 %756
    %vm759 = vcmask 523264
    %v761 = vsel %vm759, %v752, 0
    %763 = vmatpush.msra.mxu0 0.0
    %764 = vmatpush.msra.mxu0 0.0
    %765 = vmatpush.msra.mxu0 0.0
    %766 = vmatpush.msra.mxu0 0.0
    %767 = vmatpush.msra.mxu0 0.0
    %768 = vmatpush.msra.mxu0 0.0
    %769 = vmatpush.msra.mxu0 0.0
    %770 = vmatpush.msra.mxu0 0.0
    %771 = vmatpush.msra.mxu0 %v751
    %772 = vmatpush.msra.mxu0 %v750
    %773 = vmatpush.msra.mxu0 %v749
    %774 = vmatpush.msra.mxu0 %v748
    %775 = vmatpush.msra.mxu0 %v747
    %776 = vmatpush.msra.mxu0 %v746
    %777 = vmatpush.msra.mxu0 %v745
    %778 = vmatpush.msra.mxu0 %v744
    %779 = vmatmul.f32.gmra.mxu0 %v761
    %v780 = vpop.f32.mrf.mxu0
    %v781 = vadd.f32 %v757, %v780
    %782 = vdwg.mxu0
    %v784 = vrot.slane %v781, 1
    %v786 = vmax.f32 %v781, %v784
    %v787 = vrot.slane %v781, 2
    %v789 = vmax.f32 %v786, %v787
    %v790 = vperm.slane %v789, 0
    %v791 = vsub.f32 %v781, %v790
    %v792 = vmul.f32 %v791, 1.442695
    %v793 = vpow.pop %v792
    %v795 = vrot.slane %v793, 1
    %v797 = vadd.f32 %v793, %v795
    %v798 = vrot.slane %v793, 2
    %v800 = vadd.f32 %v797, %v798
    %v801 = vrcp.pop %v800
    %v802 = vmul.f32 %v800, %v801
    %v803 = vsub.f32 2.0, %v802
    %v804 = vmul.f32 %v801, %v803
    %v805 = vmul.f32 %v800, %v804
    %v806 = vsub.f32 2.0, %v805
    %v807 = vmul.f32 %v804, %v806
    %v808 = vperm.slane %v807, 0
    %v809 = vmul.f32 %v793, %v808
    %vm810 = vcmask 59392
    %811 = vst.msk [vmem:[#allocation2] sm:$0x7] %vm810, %v809
    // Predicated region
    $region30: #{meta_classifier_section.1} parent=1 // pred_check
      _
    $region31: #{meta_classifier_section.1} parent=1 // pred_check_branch
      %813 = sbr.rel (0) target = $region33
    $region32: #{meta_classifier_section.1} parent=1 // pred_region
      %815 = vsyncadd [#allocation3], 0
      %s817 = sshll.u32 [#allocation2], 4
      %s818 = int_to_ptr.vmem [resolvable:$true] %s817
      %s819 = sshll.u32 %s7, 4
      %s820 = int_to_ptr.hbm [resolvable:$true] %s819
      %822 = dma.vmem_to_hbm [thread:$0]  %s818, 64, %s820, [#allocation3]
    $region33: #{meta_classifier_section.1} parent=1 // pred_fallthru
      _
    // Predicated region
    $region34: #{meta_classifier_section.1} parent=1 // pred_check
      _
    $region35: #{meta_classifier_section.1} parent=1 // pred_check_branch
      %824 = sbr.rel (0) target = $region37
    $region36: #{meta_classifier_section.1} parent=1 // pred_region
      %826 = dma.done [#allocation3], 64
    $region37: #{meta_classifier_section.1} parent=1 // pred_fallthru
      _
    %827 = vsyncpa [#allocation3], 1

</llo_original>
